<compile_context>
chip_gen: v7x
topology: tpu7x:2x2x1
jax: 0.10.0
libtpu: 0.0.40
codegen_flags: <defaults>
</compile_context>

<pallas_src>
import jax
import jax.numpy as jnp
from jax.experimental import pallas as pl
from jax.experimental.pallas import tpu as pltpu

_LANES = 128
_SUBLANES = 8


def _round_up(n: int, m: int) -> int:
    return ((n + m - 1) // m) * m


def titanic_kernel(x_ref, w1_ref, b1_ref, w2_ref, b2_ref, o_ref):
    # fc1 on the MXU: (TB, I) @ (I, HP) -> (TB, HP) with f32 accumulation.
    h = jnp.dot(x_ref[...], w1_ref[...], preferred_element_type=jnp.float32)
    # bias + ReLU on the VPU.
    h = jnp.maximum(h + b1_ref[...], 0.0)
    # fc2 (output_size == 1): per-row dot with the single w2 column, done as a
    # VPU multiply + lane reduction instead of a 1-wide MXU matmul.
    out = jnp.sum(h * w2_ref[...], axis=-1, keepdims=True) + b2_ref[0]
    # Lane-dense store: broadcast the (TB, 1) column across all 128 lanes.
    o_ref[...] = jnp.broadcast_to(out, o_ref.shape).astype(o_ref.dtype)


def titanic_forward(x, w1, b1, w2, b2, *, tb=512):
    """y = relu(x @ w1 + b1) @ w2 + b2, specialized for w2 of shape (H, 1)."""
    B, I = x.shape
    H = w1.shape[1]
    O = w2.shape[1]
    # TODO(synk): general output_size > 1 would use an MXU fc2 with the output
    # lane dim padded to 128; TitanicModel uses output_size == 1.
    assert O == 1, "kernel is specialized for TitanicModel's output_size == 1"

    HP = _round_up(H, _LANES)                                   # lane-pad hidden
    TB = min(_round_up(tb, _SUBLANES), _round_up(B, _SUBLANES))  # batch tile
    Bp = _round_up(B, TB)

    f32 = jnp.float32
    w1p = jnp.zeros((I, HP), f32).at[:, :H].set(w1.astype(f32))
    b1p = jnp.zeros((1, HP), f32).at[:, :H].set(b1.reshape(1, H).astype(f32))
    w2p = jnp.zeros((1, HP), f32).at[:, :H].set(w2.astype(f32).T)  # (1, HP) row
    b2s = b2.reshape(1).astype(f32)                                # SMEM scalar
    xp = x.astype(f32)
    if Bp != B:
        xp = jnp.pad(xp, ((0, Bp - B), (0, 0)))

    out_padded = pl.pallas_call(
        titanic_kernel,
        out_shape=jax.ShapeDtypeStruct((Bp, _LANES), f32),
        grid=(Bp // TB,),
        in_specs=[
            pl.BlockSpec((TB, I), lambda i: (i, 0)),            # x: tiled batch
            pl.BlockSpec((I, HP), lambda i: (0, 0)),             # w1: resident
            pl.BlockSpec((1, HP), lambda i: (0, 0)),             # b1: resident
            pl.BlockSpec((1, HP), lambda i: (0, 0)),             # w2 row: resident
            pl.BlockSpec(memory_space=pltpu.MemorySpace.SMEM),   # b2: scalar
        ],
        out_specs=pl.BlockSpec((TB, _LANES), lambda i: (i, 0)),
        compiler_params=pltpu.CompilerParams(
            dimension_semantics=("parallel",)),
    )(xp, w1p, b1p, w2p, b2s)

    # Drop batch padding and the lane-dense staging columns.
    return out_padded[:B, :O]


def init_params(key, input_size, hidden_size, output_size):
    # Deterministic init mimicking nn.Linear default (uniform +/- 1/sqrt(fan_in)).
    k1, k2, k3, k4 = jax.random.split(key, 4)
    lim1 = 1.0 / jnp.sqrt(jnp.float32(input_size))
    lim2 = 1.0 / jnp.sqrt(jnp.float32(hidden_size))
    w1 = jax.random.uniform(k1, (input_size, hidden_size), jnp.float32, -lim1, lim1)
    b1 = jax.random.uniform(k2, (hidden_size,), jnp.float32, -lim1, lim1)
    w2 = jax.random.uniform(k3, (hidden_size, output_size), jnp.float32, -lim2, lim2)
    b2 = jax.random.uniform(k4, (output_size,), jnp.float32, -lim2, lim2)
    return w1, b1, w2, b2


if __name__ == "__main__":
    # Titanic-ish sizes: 8 features, 32 hidden, 1 output. batch=40 with tb=16
    # exercises batch tiling + padding (3 grid steps); tb=512 is the realistic
    # large-batch tile and fits comfortably in v7x's 64 MiB VMEM.
    batch, input_size, hidden_size, output_size = 40, 8, 32, 1

    key = jax.random.PRNGKey(0)
    kx, kp = jax.random.split(key)
    x = jax.random.normal(kx, (batch, input_size), jnp.float32)
    w1, b1, w2, b2 = init_params(kp, input_size, hidden_size, output_size)

    out = titanic_forward(x, w1, b1, w2, b2, tb=16)
    out = jax.block_until_ready(out)

    # Pure-JAX reference check.
    ref = jnp.maximum(x @ w1 + b1[None, :], 0.0) @ w2 + b2[None, :]
    assert out.shape == (batch, output_size), out.shape
    assert jnp.allclose(out, ref, atol=1e-4, rtol=1e-4), \
        float(jnp.max(jnp.abs(out - ref)))

    print("KERNEL_OK")
</pallas_src>

<mosaic_0001>
module attributes {stable_mosaic.version = 11 : i64} {
  func.func @titanic_kernel(%arg0: i32, %arg1: memref<16x8xf32, #tpu.memory_space<vmem>>, %arg2: memref<8x128xf32, #tpu.memory_space<vmem>>, %arg3: memref<1x128xf32, #tpu.memory_space<vmem>>, %arg4: memref<1x128xf32, #tpu.memory_space<vmem>>, %arg5: memref<1xf32, #tpu.memory_space<smem>>, %arg6: memref<16x128xf32, #tpu.memory_space<vmem>>) attributes {dimension_semantics = [#tpu.dimension_semantics<parallel>], iteration_bounds = array<i64: 3>, scalar_prefetch = 0 : i64, scratch_operands = 0 : i64, tpu.core_type = #tpu.core_type<tc>, window_params = [{transform_indices = @transform_0, window_bounds = array<i64: 16, 8>}, {pipeline_mode = #tpu.pipeline_mode<synchronous>, transform_indices = @transform_1, window_bounds = array<i64: 8, 128>}, {pipeline_mode = #tpu.pipeline_mode<synchronous>, transform_indices = @transform_2, window_bounds = array<i64: 1, 128>}, {pipeline_mode = #tpu.pipeline_mode<synchronous>, transform_indices = @transform_3, window_bounds = array<i64: 1, 128>}, {transform_indices = @transform_4, window_bounds = array<i64: 1>}, {transform_indices = @transform_5, window_bounds = array<i64: 16, 128>}]} {
    %c0 = arith.constant 0 : index
    %c0_0 = arith.constant 0 : index
    %0 = vector.load %arg1[%c0, %c0_0] : memref<16x8xf32, #tpu.memory_space<vmem>>, vector<16x8xf32>
    %c0_1 = arith.constant 0 : index
    %c0_2 = arith.constant 0 : index
    %1 = vector.load %arg2[%c0_1, %c0_2] : memref<8x128xf32, #tpu.memory_space<vmem>>, vector<8x128xf32>
    %cst = arith.constant dense<0.000000e+00> : vector<16x128xf32>
    %2 = tpu.matmul %0, %1, %cst {dimension_numbers = #tpu.dot_dimension_numbers<[1], [0], [0], [1], [0, 0, 1, 1], [], []>} : vector<16x8xf32>, vector<8x128xf32>, vector<16x128xf32> -> vector<16x128xf32>
    %c0_3 = arith.constant 0 : index
    %c0_4 = arith.constant 0 : index
    %3 = vector.load %arg3[%c0_3, %c0_4] : memref<1x128xf32, #tpu.memory_space<vmem>>, vector<1x128xf32>
    %4 = vector.broadcast %3 : vector<1x128xf32> to vector<16x128xf32>
    %5 = arith.addf %2, %4 : vector<16x128xf32>
    %cst_5 = arith.constant 0.000000e+00 : f32
    %6 = vector.broadcast %cst_5 : f32 to vector<16x128xf32>
    %7 = arith.maximumf %5, %6 : vector<16x128xf32>
    %c0_6 = arith.constant 0 : index
    %c0_7 = arith.constant 0 : index
    %8 = vector.load %arg4[%c0_6, %c0_7] : memref<1x128xf32, #tpu.memory_space<vmem>>, vector<1x128xf32>
    %9 = vector.broadcast %8 : vector<1x128xf32> to vector<16x128xf32>
    %10 = arith.mulf %7, %9 : vector<16x128xf32>
    %cst_8 = arith.constant dense<0.000000e+00> : vector<16xf32>
    %11 = vector.multi_reduction <add>, %10, %cst_8 [1] : vector<16x128xf32> to vector<16xf32>
    %12 = vector.shape_cast %11 : vector<16xf32> to vector<16x1xf32>
    %c0_9 = arith.constant 0 : index
    %13 = memref.load %arg5[%c0_9] : memref<1xf32, #tpu.memory_space<smem>>
    %14 = vector.broadcast %13 : f32 to vector<16x1xf32>
    %15 = arith.addf %12, %14 : vector<16x1xf32>
    %16 = vector.shape_cast %15 : vector<16x1xf32> to vector<16x1xf32>
    %17 = vector.broadcast %16 : vector<16x1xf32> to vector<16x128xf32>
    %c0_10 = arith.constant 0 : index
    %c0_11 = arith.constant 0 : index
    %18 = vector.load %arg6[%c0_10, %c0_11] : memref<16x128xf32, #tpu.memory_space<vmem>>, vector<16x128xf32>
    tpu.vector_store %arg6[%c0_10, %c0_11], %17 {strides = array<i32>} : memref<16x128xf32, #tpu.memory_space<vmem>>, vector<16x128xf32>,
    return
  }
  func.func @transform_0(%arg0: i32) -> (i32, i32) {
    %c0_i32 = arith.constant 0 : i32
    %c0_i32_0 = arith.constant 0 : i32
    return %arg0, %c0_i32 : i32, i32
  }
  func.func @transform_1(%arg0: i32) -> (i32, i32) {
    %c0_i32 = arith.constant 0 : i32
    %c0_i32_0 = arith.constant 0 : i32
    %c0_i32_1 = arith.constant 0 : i32
    return %c0_i32, %c0_i32_0 : i32, i32
  }
  func.func @transform_2(%arg0: i32) -> (i32, i32) {
    %c0_i32 = arith.constant 0 : i32
    %c0_i32_0 = arith.constant 0 : i32
    %c0_i32_1 = arith.constant 0 : i32
    return %c0_i32, %c0_i32_0 : i32, i32
  }
  func.func @transform_3(%arg0: i32) -> (i32, i32) {
    %c0_i32 = arith.constant 0 : i32
    %c0_i32_0 = arith.constant 0 : i32
    %c0_i32_1 = arith.constant 0 : i32
    return %c0_i32, %c0_i32_0 : i32, i32
  }
  func.func @transform_4(%arg0: i32) -> i32 {
    %c0_i32 = arith.constant 0 : i32
    %c0_i32_0 = arith.constant 0 : i32
    return %c0_i32 : i32
  }
  func.func @transform_5(%arg0: i32) -> (i32, i32) {
    %c0_i32 = arith.constant 0 : i32
    %c0_i32_0 = arith.constant 0 : i32
    return %arg0, %c0_i32 : i32, i32
  }
}

</mosaic_0001>

<llo_original>
// kernel: tpu_custom_call.1
$region0: #{tpu_custom_call.1}
  #allocation0 [shape = 'u32[]', space=smem, size = 0x4, offset = 0x4, fixed_abs, tag = 'smem constant byte address 0x4 - core index']
  #allocation1 [shape = 'u32[144,128]{1,0:T(1,128)}', space=vmem, size = 0x12000, scoped, tag = 'internal scratch']
  #allocation2 [shape = 'f32[1]{0:T(128)S(6)}', space=smem, size = 0x200, scoped, tag = 'scoped memory for tpu_custom_call.1']
  %s0 = inlined_call_operand.vmem [shape: f32[48,8], index: 0, kind: input, shape index: {}]
  %s1 = inlined_call_operand.vmem [shape: f32[8,128], index: 1, kind: input, shape index: {}]
  %s2 = inlined_call_operand.vmem [shape: f32[1,128], index: 2, kind: input, shape index: {}]
  %s3 = inlined_call_operand.vmem [shape: f32[1,128], index: 3, kind: input, shape index: {}]
  %s4 = inlined_call_operand.<no memory space> [shape: f32[1], index: 4, kind: input, shape index: {}]
  %s5 = inlined_call_operand.hbm [shape: f32[48,128], index: 5, kind: output, shape index: {}]
  %s6 = sld [smem:[#allocation0]]
  $region53: #{tpu_custom_call.1} parent=0
    _
  %s8 = ssub.s32 1, %s6
  %s9 = scalar_select 0, %s8, %s6
  %10 = sst [smem:[#allocation2]] %s4
  $region1: #{tpu_custom_call.1} parent=0
    #allocation3 [shape = 'u8[16384]{0}', space=vmem, size = 0x4000, scoped, tag = 'output window, operand 0']
    #allocation4 [shape = 's32[2]{0}', space=sflag, size = 0x8, scoped, tag = 'scoped memory for tpu_custom_call.1']
    %11 = vsyncpa [#allocation4], 0
    %s12 = scalar_lea.sflag [#allocation4], 1
    %13 = vsyncpa %s12, 0
    loop: start=0, step=1, limit=5
    $region2: #{tpu_custom_call.1} parent=1 // loop_pre_header
      _
    $region3: #{tpu_custom_call.1} parent=1 // loop_header
      %s15 = sphi 0, %s19
      %p16 = scmp.ge.s32.totalorder %s15, 5
      %s25 = sphi 0, %s27
      %s28 = sphi 0, %s25
      %s29 = sphi 0, %s28
      %s45 = sphi 0, %s29
      %s49 = sphi 0, %s49
      %s51 = sphi 0, %s49
      %s52 = sphi 0, %s51
      %s66 = sphi 0, %s52
      %s70 = sphi 0, %s70
      %s72 = sphi 0, %s70
      %s73 = sphi 0, %s72
      %s87 = sphi 0, %s73
      %s91 = sphi 0, %s91
      %s93 = sphi 0, %s91
      %s94 = sphi 0, %s93
      %s108 = sphi 0, %s94
      %s112 = sphi 0, %s112
      %s114 = sphi 0, %s112
      %s115 = sphi 0, %s114
      %s129 = sphi 0, %s115
      %s135 = sphi 0, %s137
      %s138 = sphi 0, %s135
      %s139 = sphi 0, %s138
      %s155 = sphi 0, %s139
    $region4: #{tpu_custom_call.1} parent=1 // loop_header_branch
      %18 = sbr.rel (%p16) target = $region8
    $region5: #{tpu_custom_call.1} parent=1 // loop_body
      %s20 = ssub.s32 %s15, 1
      %s21 = ssub.s32 %s15, 2
      %s22 = sadd.s32 %s15, 1
      %s23 = ssub.s32 %s15, %s22
      %p24 = scmp.eq.s32.totalorder %s23, 0
      %s26 = sadd.s32 %s25, 1
      %s27 = scalar_select %p24, %s25, %s26
      %p30 = pneg %p24
      %p31 = scmp.eq.s32.totalorder %s15, 2
      %p32 = por %p30, %p31
      %p33 = scmp.ne.s32.totalorder %s25, %s28
      %p34 = scmp.eq.s32.totalorder %s15, 0
      %p35 = por %p33, %p34
      %p36 = scmp.ne.s32.totalorder %s25, %s28
      %p37 = scmp.eq.s32.totalorder %s20, 2
      %p38 = por %p36, %p37
      %p39 = scmp.ne.s32.totalorder %s28, %s29
      %p40 = scmp.eq.s32.totalorder %s20, 0
      %p41 = por %p39, %p40
      %p42 = scmp.ne.s32.totalorder %s28, %s29
      %p43 = scmp.eq.s32.totalorder %s21, 2
      %p44 = por %p42, %p43
      %p46 = scmp.ne.s32.totalorder %s29, %s45
      %p47 = scmp.eq.s32.totalorder %s21, 0
      %p48 = por %p46, %p47
      %s50 = sadd.s32 %s49, 1
      %p53 = scmp.eq.s32.totalorder %s15, 2
      %p54 = scmp.ne.s32.totalorder %s49, %s51
      %p55 = scmp.eq.s32.totalorder %s15, 0
      %p56 = por %p54, %p55
      %p57 = scmp.ne.s32.totalorder %s49, %s51
      %p58 = scmp.eq.s32.totalorder %s20, 2
      %p59 = por %p57, %p58
      %p60 = scmp.ne.s32.totalorder %s51, %s52
      %p61 = scmp.eq.s32.totalorder %s20, 0
      %p62 = por %p60, %p61
      %p63 = scmp.ne.s32.totalorder %s51, %s52
      %p64 = scmp.eq.s32.totalorder %s21, 2
      %p65 = por %p63, %p64
      %p67 = scmp.ne.s32.totalorder %s52, %s66
      %p68 = scmp.eq.s32.totalorder %s21, 0
      %p69 = por %p67, %p68
      %s71 = sadd.s32 %s70, 1
      %p74 = scmp.eq.s32.totalorder %s15, 2
      %p75 = scmp.ne.s32.totalorder %s70, %s72
      %p76 = scmp.eq.s32.totalorder %s15, 0
      %p77 = por %p75, %p76
      %p78 = scmp.ne.s32.totalorder %s70, %s72
      %p79 = scmp.eq.s32.totalorder %s20, 2
      %p80 = por %p78, %p79
      %p81 = scmp.ne.s32.totalorder %s72, %s73
      %p82 = scmp.eq.s32.totalorder %s20, 0
      %p83 = por %p81, %p82
      %p84 = scmp.ne.s32.totalorder %s72, %s73
      %p85 = scmp.eq.s32.totalorder %s21, 2
      %p86 = por %p84, %p85
      %p88 = scmp.ne.s32.totalorder %s73, %s87
      %p89 = scmp.eq.s32.totalorder %s21, 0
      %p90 = por %p88, %p89
      %s92 = sadd.s32 %s91, 1
      %p95 = scmp.eq.s32.totalorder %s15, 2
      %p96 = scmp.ne.s32.totalorder %s91, %s93
      %p97 = scmp.eq.s32.totalorder %s15, 0
      %p98 = por %p96, %p97
      %p99 = scmp.ne.s32.totalorder %s91, %s93
      %p100 = scmp.eq.s32.totalorder %s20, 2
      %p101 = por %p99, %p100
      %p102 = scmp.ne.s32.totalorder %s93, %s94
      %p103 = scmp.eq.s32.totalorder %s20, 0
      %p104 = por %p102, %p103
      %p105 = scmp.ne.s32.totalorder %s93, %s94
      %p106 = scmp.eq.s32.totalorder %s21, 2
      %p107 = por %p105, %p106
      %p109 = scmp.ne.s32.totalorder %s94, %s108
      %p110 = scmp.eq.s32.totalorder %s21, 0
      %p111 = por %p109, %p110
      %s113 = sadd.s32 %s112, 1
      %p116 = scmp.eq.s32.totalorder %s15, 2
      %p117 = scmp.ne.s32.totalorder %s112, %s114
      %p118 = scmp.eq.s32.totalorder %s15, 0
      %p119 = por %p117, %p118
      %p120 = scmp.ne.s32.totalorder %s112, %s114
      %p121 = scmp.eq.s32.totalorder %s20, 2
      %p122 = por %p120, %p121
      %p123 = scmp.ne.s32.totalorder %s114, %s115
      %p124 = scmp.eq.s32.totalorder %s20, 0
      %p125 = por %p123, %p124
      %p126 = scmp.ne.s32.totalorder %s114, %s115
      %p127 = scmp.eq.s32.totalorder %s21, 2
      %p128 = por %p126, %p127
      %p130 = scmp.ne.s32.totalorder %s115, %s129
      %p131 = scmp.eq.s32.totalorder %s21, 0
      %p132 = por %p130, %p131
      %s133 = ssub.s32 %s15, %s22
      %p134 = scmp.eq.s32.totalorder %s133, 0
      %s136 = sadd.s32 %s135, 1
      %s137 = scalar_select %p134, %s135, %s136
      %p140 = pneg %p134
      %p141 = scmp.eq.s32.totalorder %s15, 2
      %p142 = por %p140, %p141
      %p143 = scmp.ne.s32.totalorder %s135, %s138
      %p144 = scmp.eq.s32.totalorder %s15, 0
      %p145 = por %p143, %p144
      %p146 = scmp.ne.s32.totalorder %s135, %s138
      %p147 = scmp.eq.s32.totalorder %s20, 2
      %p148 = por %p146, %p147
      %p149 = scmp.ne.s32.totalorder %s138, %s139
      %p150 = scmp.eq.s32.totalorder %s20, 0
      %p151 = por %p149, %p150
      %p152 = scmp.ne.s32.totalorder %s138, %s139
      %p153 = scmp.eq.s32.totalorder %s21, 2
      %p154 = por %p152, %p153
      %p156 = scmp.ne.s32.totalorder %s139, %s155
      %p157 = scmp.eq.s32.totalorder %s21, 0
      %p158 = por %p156, %p157
      %p159 = scmp.le.s32.totalorder 1, %s15
      %p160 = scmp.lt.s32.totalorder %s15, 4
      %p161 = pnand %p159, %p160
      %p162 = pneg %p161
      // Predicated region
      $region9: #{tpu_custom_call.1} parent=5 // pred_check
        _
      $region10: #{tpu_custom_call.1} parent=5 // pred_check_branch
        %164 = sbr.rel (%p161) target = $region12
      $region11: #{tpu_custom_call.1} parent=5 // pred_region
        %s165 = ssub.s32 %s15, 1
        // Predicated region
        $region13: #{tpu_custom_call.1} parent=11 // pred_check
          %p166 = pneg %p62
        $region14: #{tpu_custom_call.1} parent=11 // pred_check_branch
          %168 = sbr.rel (%p166) target = $region16
        $region15: #{tpu_custom_call.1} parent=11 // pred_region
          _
        $region16: #{tpu_custom_call.1} parent=11 // pred_fallthru
          _
        // Predicated region
        $region17: #{tpu_custom_call.1} parent=11 // pred_check
          %p169 = pneg %p83
        $region18: #{tpu_custom_call.1} parent=11 // pred_check_branch
          %171 = sbr.rel (%p169) target = $region20
        $region19: #{tpu_custom_call.1} parent=11 // pred_region
          _
        $region20: #{tpu_custom_call.1} parent=11 // pred_fallthru
          _
        // Predicated region
        $region21: #{tpu_custom_call.1} parent=11 // pred_check
          %p172 = pneg %p104
        $region22: #{tpu_custom_call.1} parent=11 // pred_check_branch
          %174 = sbr.rel (%p172) target = $region24
        $region23: #{tpu_custom_call.1} parent=11 // pred_region
          _
        $region24: #{tpu_custom_call.1} parent=11 // pred_fallthru
          _
        // Predicated region
        $region25: #{tpu_custom_call.1} parent=11 // pred_check
          %p175 = pneg %p125
        $region26: #{tpu_custom_call.1} parent=11 // pred_check_branch
          %177 = sbr.rel (%p175) target = $region28
        $region27: #{tpu_custom_call.1} parent=11 // pred_region
          _
        $region28: #{tpu_custom_call.1} parent=11 // pred_fallthru
          _
      $region12: #{tpu_custom_call.1} parent=5 // pred_fallthru
        _
      %p178 = scmp.lt.s32.totalorder %s15, 3
      // Predicated region
      $region29: #{tpu_custom_call.1} parent=5 // pred_check
        %p179 = pneg %p178
      $region30: #{tpu_custom_call.1} parent=5 // pred_check_branch
        %181 = sbr.rel (%p179) target = $region32
      $region31: #{tpu_custom_call.1} parent=5 // pred_region
        // Predicated region
        $region33: #{tpu_custom_call.1} parent=31 // pred_check
          %p182 = pneg %p35
        $region34: #{tpu_custom_call.1} parent=31 // pred_check_branch
          %184 = sbr.rel (%p182) target = $region36
        $region35: #{tpu_custom_call.1} parent=31 // pred_region
          %s185 = smul.u32 2, %s15
          %p186 = scmp.lt.s32.totalorder %s185, 5
          %s187 = scalar_select %p186, %s185, 5
          %s188 = smul.addr %s187, 8
          %s189 = scalar_lea.vmem %s0, %s188
          %s190 = smul.u32 2, %s15
        $region36: #{tpu_custom_call.1} parent=31 // pred_fallthru
          _
      $region32: #{tpu_custom_call.1} parent=5 // pred_fallthru
        _
      %p191 = scmp.le.s32.totalorder 1, %s15
      %p192 = scmp.lt.s32.totalorder %s15, 4
      %p193 = pnand %p191, %p192
      %p194 = pneg %p193
      // Predicated region
      $region37: #{tpu_custom_call.1} parent=5 // pred_check
        _
      $region38: #{tpu_custom_call.1} parent=5 // pred_check_branch
        %196 = sbr.rel (%p193) target = $region40
      $region39: #{tpu_custom_call.1} parent=5 // pred_region
        %s197 = ssub.s32 %s15, 1
        %s198 = smul.u32 2, %s20
        %p199 = scmp.lt.s32.totalorder %s198, 5
        %s200 = scalar_select %p199, %s198, 5
        %s201 = smul.addr %s200, 8
        %s202 = scalar_lea.vmem %s0, %s201
        %p203 = pneg %p41
        %p204 = pneg %p38
        %p205 = pneg %p62
        %p206 = pneg %p59
        %p207 = pneg %p83
        %p208 = pneg %p80
        %p209 = pneg %p104
        %p210 = pneg %p101
        %p211 = pneg %p125
        %p212 = pneg %p122
        %p213 = pneg %p151
        %p214 = pneg %p148
        %s215 = sand.u32 %s138, 1
        %s216 = scalar_lea.sflag [#allocation4], %s215
        %s217 = sand.u32 %s138, 1
        %s218 = smul.addr %s217, 16
        %s219 = scalar_lea.vmem [#allocation3], %s218
        %s220 = smul.u32 2, %s20
        %p221 = scmp.lt.s32.totalorder %s220, 5
        %s222 = scalar_select %p221, %s220, 5
        %s223 = smul.addr %s222, 8
        %s224 = scalar_lea.vmem %s0, %s223
        %s225 = smul.u32 2, %s20
        %s226 = smul.u32 2, %s20
        %v227 = vld [vmem:[%s224] sm:$0xff]
        %v228 = vld [vmem:[%s224 + $0x8] sm:$0xff]
        %v229 = vld [vmem:[%s1] sm:$0xff]
        %v230 = vld [vmem:[%s2] sm:$0x1]
        %v232 = vlaneseq
        %v233 = vshrl.u32 %v232, 7
        %v234 = vsub.s32 0, %v233
        %v235 = vrot.slane %v230, %v234
        %vm237 = vcmask 64512
        %v239 = vsel %vm237, %v227, 0
        %v242 = vsel %vm237, %v228, 0
        %244 = vmatprep.subr.mxu0 0.0
        %245 = vmatpush1.msra.mxu0 %v229
        %246 = vmatprep.subr.mxu0 0.0
        %247 = vmatpush1.msra.mxu0 0.0
        %248 = vmatprep.subr.mxu0 0.0
        %249 = vmatpush1.msra.mxu0 0.0
        %250 = vmatprep.subr.mxu0 0.0
        %251 = vmatpush1.msra.mxu0 0.0
        %252 = vmatprep.subr.mxu0 0.0
        %253 = vmatpush1.msra.mxu0 0.0
        %254 = vmatprep.subr.mxu0 0.0
        %255 = vmatpush1.msra.mxu0 0.0
        %256 = vmatprep.subr.mxu0 0.0
        %257 = vmatpush1.msra.mxu0 0.0
        %258 = vmatprep.subr.mxu0 0.0
        %259 = vmatpush1.msra.mxu0 0.0
        %260 = vmatprep.subr.mxu0 0.0
        %261 = vmatpush1.msra.mxu0 0.0
        %262 = vmatprep.subr.mxu0 0.0
        %263 = vmatpush1.msra.mxu0 0.0
        %264 = vmatprep.subr.mxu0 0.0
        %265 = vmatpush1.msra.mxu0 0.0
        %266 = vmatprep.subr.mxu0 0.0
        %267 = vmatpush1.msra.mxu0 0.0
        %268 = vmatprep.subr.mxu0 0.0
        %269 = vmatpush1.msra.mxu0 0.0
        %270 = vmatprep.subr.mxu0 0.0
        %271 = vmatpush1.msra.mxu0 0.0
        %272 = vmatprep.subr.mxu0 0.0
        %273 = vmatpush1.msra.mxu0 0.0
        %274 = vmatprep.subr.mxu0 0.0
        %275 = vmatpush1.msra.mxu0 0.0
        %276 = vmatprep.subr.mxu0 0.0
        %277 = vmatpush1.msra.mxu0 0.0
        %278 = vmatprep.subr.mxu0 0.0
        %279 = vmatpush1.msra.mxu0 0.0
        %280 = vmatprep.subr.mxu0 0.0
        %281 = vmatpush1.msra.mxu0 0.0
        %282 = vmatprep.subr.mxu0 0.0
        %283 = vmatpush1.msra.mxu0 0.0
        %284 = vmatprep.subr.mxu0 0.0
        %285 = vmatpush1.msra.mxu0 0.0
        %286 = vmatprep.subr.mxu0 0.0
        %287 = vmatpush1.msra.mxu0 0.0
        %288 = vmatprep.subr.mxu0 0.0
        %289 = vmatpush1.msra.mxu0 0.0
        %290 = vmatprep.subr.mxu0 0.0
        %291 = vmatpush1.msra.mxu0 0.0
        %292 = vmatprep.subr.mxu0 0.0
        %293 = vmatpush1.msra.mxu0 0.0
        %294 = vmatprep.subr.mxu0 0.0
        %295 = vmatpush1.msra.mxu0 0.0
        %296 = vmatprep.subr.mxu0 0.0
        %297 = vmatpush1.msra.mxu0 0.0
        %298 = vmatprep.subr.mxu0 0.0
        %299 = vmatpush1.msra.mxu0 0.0
        %300 = vmatprep.subr.mxu0 0.0
        %301 = vmatpush1.msra.mxu0 0.0
        %302 = vmatprep.subr.mxu0 0.0
        %303 = vmatpush1.msra.mxu0 0.0
        %304 = vmatprep.subr.mxu0 0.0
        %305 = vmatpush1.msra.mxu0 0.0
        %306 = vmatprep.subr.mxu0 0.0
        %307 = vmatpush1.msra.mxu0 0.0
        %308 = vmatprep.mubr.f32.mxu0 0.0
        %309 = vmatmul.mubr.f32.gmra.mrb[0].mxu0 %v239
        %v310 = vpop.f32.mrb[0].mxu0
        %v311 = vadd.f32 %v235, %v310
        %v312 = vpop.f32.mrb[0].mxu0
        %313 = vmatprep.mubr.f32.mxu0 0.0
        %314 = vmatmul.mubr.f32.gmra.mrb[0].mxu0 %v242
        %v315 = vpop.f32.mrb[0].mxu0
        %v316 = vadd.f32 %v235, %v315
        %v317 = vpop.f32.mrb[0].mxu0
        %318 = vdwg.mxu0
        %v319 = vmax.f32 %v311, 0.0
        %v320 = vmax.f32 %v316, 0.0
        %v321 = vld [vmem:[%s3] sm:$0x1]
        %v323 = vlaneseq
        %v324 = vshrl.u32 %v323, 7
        %v325 = vsub.s32 0, %v324
        %v326 = vrot.slane %v321, %v325
        %v328 = vmul.f32 %v319, %v326
        %v329 = vmul.f32 %v320, %v326
        %330 = vadd.xlane.f32.xlu0 %v328
        %v331 = vpop.xlane.xlu0 %330
        %332 = vadd.xlane.f32.xlu0 %v329
        %v333 = vpop.xlane.xlu0 %332
        %s334 = sld [smem:[#allocation2]]
        %v335 = vstv %s334
        %v336 = vadd.f32 %v331, %v335
        %v337 = vadd.f32 %v333, %v335
        %338 = vst [vmem:[%s219] sm:$0xff] %v336
        %339 = vst [vmem:[%s219 + $0x8] sm:$0xff] %v337
        %s340 = sand.u32 %s138, 1
        %s341 = scalar_lea.sflag [#allocation4], %s340
        %s342 = sand.u32 %s138, 1
        %s343 = smul.addr %s342, 16
        %s344 = scalar_lea.vmem [#allocation3], %s343
        // Predicated region
        $region41: #{tpu_custom_call.1} parent=39 // pred_check
          %p345 = pneg %p148
        $region42: #{tpu_custom_call.1} parent=39 // pred_check_branch
          %347 = sbr.rel (%p345) target = $region44
        $region43: #{tpu_custom_call.1} parent=39 // pred_region
          %s348 = smul.u32 2, %s20
          %s350 = ssub.s32 256, 256
          %351 = vsyncadd %s341, %s350
          %s352 = smul.addr %s348, 128
          %s353 = scalar_lea.hbm %s5, %s352
          %s354 = sshll.u32 %s344, 4
          %s355 = int_to_ptr.vmem [resolvable:$true] %s354
          %360 = dma.vmem_to_hbm [thread:$0]  %s355, 256, %s353, %s341, 128, 128, 8
        $region44: #{tpu_custom_call.1} parent=39 // pred_fallthru
          _
      $region40: #{tpu_custom_call.1} parent=5 // pred_fallthru
        _
      %p361 = scmp.le.s32.totalorder 2, %s15
      // Predicated region
      $region45: #{tpu_custom_call.1} parent=5 // pred_check
        %p362 = pneg %p361
      $region46: #{tpu_custom_call.1} parent=5 // pred_check_branch
        %364 = sbr.rel (%p362) target = $region48
      $region47: #{tpu_custom_call.1} parent=5 // pred_region
        %s365 = ssub.s32 %s15, 2
        // Predicated region
        $region49: #{tpu_custom_call.1} parent=47 // pred_check
          %p366 = pneg %p154
        $region50: #{tpu_custom_call.1} parent=47 // pred_check_branch
          %368 = sbr.rel (%p366) target = $region52
        $region51: #{tpu_custom_call.1} parent=47 // pred_region
          %s369 = sand.u32 %s139, 1
          %s370 = scalar_lea.sflag [#allocation4], %s369
          %s371 = sand.u32 %s139, 1
          %s372 = smul.addr %s371, 16
          %s373 = scalar_lea.vmem [#allocation3], %s372
          %374 = dma.done %s370, 256
        $region52: #{tpu_custom_call.1} parent=47 // pred_fallthru
          _
      $region48: #{tpu_custom_call.1} parent=5 // pred_fallthru
        _
    $region6: #{tpu_custom_call.1} parent=1 // loop_footer
      %s19 = sadd.s32 1, %s15
    $region7: #{tpu_custom_call.1} parent=1 // loop_footer_branch
      %14 = sbr.rel target = $region3
    $region8: #{tpu_custom_call.1} parent=1 // loop_exit
      _
    %375 = vsyncpa [#allocation4], 1
    %s376 = scalar_lea.sflag [#allocation4], 1
    %377 = vsyncpa %s376, 1

</llo_original>
